<compile_context>
chip_gen: v7x
topology: tpu7x:2x2x1
jax: 0.10.0
libtpu: 0.0.40
codegen_flags: <defaults>
</compile_context>

<pallas_src>
from functools import partial

import jax
import jax.numpy as jnp
from jax import lax
from jax.experimental import pallas as pl
from jax.experimental.pallas import tpu as pltpu

BN_EPS = 1e-5


def _bn(y, gb):
    # One-pass BatchNorm (training mode): mean = E[y], var = E[y^2] - mean^2 (f32, clamped).
    # y: (C, M) f32;  gb: (C, 2) f32 with columns [gamma, beta].
    inv_m = 1.0 / y.shape[1]
    s1 = jnp.sum(y, axis=1, keepdims=True)
    s2 = jnp.sum(y * y, axis=1, keepdims=True)
    mean = s1 * inv_m
    var = jnp.maximum(s2 * inv_m - mean * mean, 0.0)
    scale = gb[:, 0:1] * lax.rsqrt(var + BN_EPS)
    shift = gb[:, 1:2] - mean * scale
    return y * scale + shift


def _make_bottleneck_kernel(*, img_w, c1, m0, m1, downsample):
    def kernel(*refs):
        if downsample:
            (x_ref, w1_ref, gb1_ref, w2_ref, gb2_ref, w3_ref, gb3_ref,
             mask_ref, sub_ref, res_ref, o_ref) = refs
        else:
            (x_ref, w1_ref, gb1_ref, w2_ref, gb2_ref, w3_ref, gb3_ref,
             mask_ref, res_ref, o_ref) = refs

        f32 = jnp.float32
        x = x_ref[...]                                                 # (cin, m0)

        # ---------------- conv1 (1x1) + bn1 + relu : (c1,cin)@(cin,m0) ----------------
        y1 = jnp.dot(w1_ref[...], x, preferred_element_type=f32)      # (c1, m0)
        y1 = jnp.maximum(_bn(y1, gb1_ref[...]), 0.0)

        # ------- conv2 (3x3, pad 1) at full resolution via 9 static lane shifts -------
        # Each tap is a roll of y1 along M plus a precomputed border-validity mask; the 9
        # taps are stacked so conv2 is ONE matmul with K = 9*c1 (no per-tap MXU gathers).
        taps = []
        for kh in range(3):
            for kw in range(3):
                d = (kh - 1) * img_w + (kw - 1)
                t = kh * 3 + kw
                shifted = y1 if d == 0 else jnp.roll(y1, shift=-d, axis=1)
                if kh == 1 and kw == 1:
                    taps.append(shifted)                               # centre tap: all valid
                else:
                    taps.append(shifted * mask_ref[t:t + 1, :])        # (c1, m0)
        stacked = jnp.concatenate(taps, axis=0)                        # (9*c1, m0)
        z = jnp.dot(w2_ref[...], stacked, preferred_element_type=f32)  # (c1, m0) stride-1 conv

        if downsample:
            # single stride-2 subsample: pick columns (2*oh, 2*ow) with one 0/1 matmul.
            z = jnp.dot(z, sub_ref[...], preferred_element_type=f32)   # (c1, m1)
        y2 = jnp.maximum(_bn(z, gb2_ref[...]), 0.0)

        # ---------------- conv3 (1x1) + bn3 : (cout,c1)@(c1,m1) -----------------------
        y3 = jnp.dot(w3_ref[...], y2, preferred_element_type=f32)      # (cout, m1)
        y3 = _bn(y3, gb3_ref[...])

        # ------------- residual add (precomputed in wrapper, exact) + relu ------------
        o_ref[...] = jnp.maximum(y3 + res_ref[...], 0.0)               # lane-dense store

    return kernel


# ------------------------------- Bottleneck forward -------------------------------- #
@partial(jax.jit, static_argnames=("stride", "identity_method"))
def bottleneck_forward(x_nchw, params, *, stride, identity_method="A"):
    x_nchw = x_nchw.astype(jnp.float32)
    n, cin, h, w = x_nchw.shape
    c1 = params["w1"].shape[1]
    cout = 4 * c1
    downsample = cin != cout

    if downsample and identity_method != "A":
        # TODO(synk): identity_method 'B' (1x1-conv + BN shortcut) not wired in this config.
        raise NotImplementedError("identity_method 'B' not implemented")
    if downsample and stride != 2:
        raise ValueError("identity 'A' (zero-pad) shortcut requires stride == 2")
    if (not downsample) and stride != 1:
        raise ValueError("identity shortcut (cin == cout) requires stride == 1")

    ho = (h + 2 - 3) // stride + 1
    wo = (w + 2 - 3) // stride + 1
    m0, m1 = n * h * w, n * ho * wo

    # Glue: lane-dense transposed layouts (channels on sublanes, M = N*H*W on lanes).
    x_t = jnp.transpose(x_nchw, (1, 0, 2, 3)).reshape(cin, m0)
    w1_t = jnp.transpose(params["w1"], (1, 0))                         # (c1, cin)
    # fused conv2 weight: columns tap-major then input-channel -> (c1, 9*c1)
    w2f = jnp.transpose(params["w2"], (3, 0, 1, 2)).reshape(c1, 9 * c1)
    w3_t = jnp.transpose(params["w3"], (1, 0))                         # (cout, c1)
    gb = lambda g, b: jnp.stack([g, b], axis=1).astype(jnp.float32)    # (C, 2) [gamma, beta]

    # Per-tap border-validity masks (identical for every image), shape (9, m0).
    hh = jnp.arange(h)
    ww = jnp.arange(w)
    mask_rows = []
    for kh in range(3):
        for kw in range(3):
            mh = (hh + (kh - 1) >= 0) & (hh + (kh - 1) < h)
            mw = (ww + (kw - 1) >= 0) & (ww + (kw - 1) < w)
            m2 = (mh[:, None] & mw[None, :]).astype(jnp.float32).reshape(1, h * w)
            mask_rows.append(jnp.tile(m2, (1, n)).reshape(m0))
    mask_arr = jnp.stack(mask_rows, axis=0)                            # (9, m0)

    # Residual path computed in the wrapper (exact; tiny strided slice + zero channel pad).
    if downsample:
        res = x_nchw[:, :, ::2, ::2]
        res = jnp.pad(res, ((0, 0), (0, cout - cin), (0, 0), (0, 0)))
        res_t = jnp.transpose(res, (1, 0, 2, 3)).reshape(cout, m1)
    else:
        res_t = x_t                                                    # cin == cout, m0 == m1

    inputs = [x_t, w1_t, gb(params["g1"], params["b1"]),
              w2f, gb(params["g2"], params["b2"]),
              w3_t, gb(params["g3"], params["b3"]),
              mask_arr]
    if downsample:
        # stride-2 column-subsample selection matrix (m0, m1), 0/1, precomputed once.
        src = (jnp.arange(n)[:, None, None] * (h * w)
               + (stride * jnp.arange(ho))[None, :, None] * w
               + (stride * jnp.arange(wo))[None, None, :]).reshape(1, m1)
        sub = (jnp.arange(m0)[:, None] == src).astype(jnp.float32)     # (m0, m1)
        inputs.append(sub)
    inputs.append(res_t)

    kernel = _make_bottleneck_kernel(img_w=w, c1=c1, m0=m0, m1=m1, downsample=downsample)

    flops = 2 * c1 * cin * m0                       # conv1
    flops += 2 * c1 * (9 * c1) * m0                 # fused conv2 taps at full resolution
    flops += 2 * cout * c1 * m1                     # conv3
    if downsample:
        flops += 2 * c1 * m0 * m1                   # stride-2 subsample matmul
    bytes_accessed = 4 * (cin * m0 + c1 * cin + c1 * 9 * c1 + cout * c1
                          + 2 * (2 * c1 + cout) + 9 * m0
                          + (m0 * m1 if downsample else 0)
                          + cout * m1 + cout * m1)

    vmem_spec = lambda: pl.BlockSpec(memory_space=pltpu.MemorySpace.VMEM)
    out_t = pl.pallas_call(
        kernel,
        out_shape=jax.ShapeDtypeStruct((cout, m1), jnp.float32),
        in_specs=[vmem_spec() for _ in inputs],
        out_specs=vmem_spec(),
        cost_estimate=pl.CostEstimate(
            flops=int(flops),
            transcendentals=int(2 * c1 + cout),
            bytes_accessed=int(bytes_accessed)),
    )(*inputs)

    out = out_t.reshape(cout, n, ho, wo)
    return jnp.transpose(out, (1, 0, 2, 3))          # back to NCHW


# --------------------------- pure-JAX reference (checking) -------------------------- #
def reference_forward(x, params, *, stride):
    prec = lax.Precision.HIGHEST

    def conv(y, w_oihw, s, pad):
        return lax.conv_general_dilated(
            y, w_oihw, (s, s), [(pad, pad), (pad, pad)],
            dimension_numbers=("NCHW", "OIHW", "NCHW"), precision=prec)

    def bn(y, g, b):
        mean = jnp.mean(y, axis=(0, 2, 3), keepdims=True)
        var = jnp.mean((y - mean) ** 2, axis=(0, 2, 3), keepdims=True)
        return (y - mean) * lax.rsqrt(var + BN_EPS) * g.reshape(1, -1, 1, 1) + b.reshape(1, -1, 1, 1)

    cin = x.shape[1]
    c1 = params["w1"].shape[1]
    cout = 4 * c1
    w1 = jnp.transpose(params["w1"], (1, 0))[:, :, None, None]          # OIHW
    w2 = jnp.transpose(params["w2"], (3, 2, 0, 1))                      # (cout, cin, kh, kw)
    w3 = jnp.transpose(params["w3"], (1, 0))[:, :, None, None]

    out = jax.nn.relu(bn(conv(x, w1, 1, 0), params["g1"], params["b1"]))
    out = jax.nn.relu(bn(conv(out, w2, stride, 1), params["g2"], params["b2"]))
    out = bn(conv(out, w3, 1, 0), params["g3"], params["b3"])
    if cin != cout:
        res = x[:, :, ::2, ::2]
        res = jnp.pad(res, ((0, 0), (0, cout - cin), (0, 0), (0, 0)))
    else:
        res = x
    return jax.nn.relu(out + res)


# ---------------------------------------- main -------------------------------------- #
if __name__ == "__main__":
    key = jax.random.PRNGKey(0)

    def make_params(k, cin, c1):
        cout = 4 * c1
        ks = jax.random.split(k, 9)
        return {
            "w1": 0.1 * jax.random.normal(ks[0], (cin, c1), jnp.float32),
            "w2": 0.1 * jax.random.normal(ks[1], (3, 3, c1, c1), jnp.float32),
            "w3": 0.1 * jax.random.normal(ks[2], (c1, cout), jnp.float32),
            "g1": 1.0 + 0.1 * jax.random.normal(ks[3], (c1,), jnp.float32),
            "b1": 0.1 * jax.random.normal(ks[4], (c1,), jnp.float32),
            "g2": 1.0 + 0.1 * jax.random.normal(ks[5], (c1,), jnp.float32),
            "b2": 0.1 * jax.random.normal(ks[6], (c1,), jnp.float32),
            "g3": 1.0 + 0.1 * jax.random.normal(ks[7], (cout,), jnp.float32),
            "b3": 0.1 * jax.random.normal(ks[8], (cout,), jnp.float32),
        }

    k1, k2, kx1, kx2 = jax.random.split(key, 4)
    N, H, W = 2, 16, 16

    def check(out, ref):
        # Tolerances sized for default-precision MXU passes on real TPU (f32 accumulation,
        # f32 BatchNorm math); interpret/CPU execution is exact f32 and passes trivially.
        max_err = float(jnp.max(jnp.abs(out - ref)))
        rel_err = float(jnp.linalg.norm(out - ref) / jnp.linalg.norm(ref))
        assert max_err < 5e-2 and rel_err < 2.5e-2, (max_err, rel_err)

    # Config 1: downsampling bottleneck (identity 'A', stride 2) — the spec's example case.
    cin1, c1a, stride1 = 8, 4, 2
    params1 = make_params(k1, cin1, c1a)
    x1 = jax.random.normal(kx1, (N, cin1, H, W), jnp.float32)           # NCHW like PyTorch
    out1 = jax.block_until_ready(bottleneck_forward(x1, params1, stride=stride1))
    assert out1.shape == (N, 4 * c1a, H // stride1, W // stride1), out1.shape
    check(out1, reference_forward(x1, params1, stride=stride1))

    # Config 2: identity bottleneck (cin == cout, stride 1) — exercises the identity path.
    cin2, c1b, stride2 = 16, 4, 1
    params2 = make_params(k2, cin2, c1b)
    x2 = jax.random.normal(kx2, (N, cin2, H, W), jnp.float32)
    out2 = jax.block_until_ready(bottleneck_forward(x2, params2, stride=stride2))
    assert out2.shape == (N, 4 * c1b, H, W), out2.shape
    check(out2, reference_forward(x2, params2, stride=stride2))

    print("KERNEL_OK")
</pallas_src>

<mosaic_0001>
module attributes {stable_mosaic.version = 11 : i64} {
  func.func @kernel(%arg0: memref<8x512xf32, #tpu.memory_space<vmem>>, %arg1: memref<4x8xf32, #tpu.memory_space<vmem>>, %arg2: memref<4x2xf32, #tpu.memory_space<vmem>>, %arg3: memref<4x36xf32, #tpu.memory_space<vmem>>, %arg4: memref<4x2xf32, #tpu.memory_space<vmem>>, %arg5: memref<16x4xf32, #tpu.memory_space<vmem>>, %arg6: memref<16x2xf32, #tpu.memory_space<vmem>>, %arg7: memref<9x512xf32, #tpu.memory_space<vmem>>, %arg8: memref<512x128xf32, #tpu.memory_space<vmem>>, %arg9: memref<16x128xf32, #tpu.memory_space<vmem>>, %arg10: memref<16x128xf32, #tpu.memory_space<vmem>>) attributes {dimension_semantics = [], scalar_prefetch = 0 : i64, scratch_operands = 0 : i64, tpu.core_type = #tpu.core_type<tc>} {
    %c0 = arith.constant 0 : index
    %c0_0 = arith.constant 0 : index
    %0 = vector.load %arg0[%c0, %c0_0] : memref<8x512xf32, #tpu.memory_space<vmem>>, vector<8x512xf32>
    %c0_1 = arith.constant 0 : index
    %c0_2 = arith.constant 0 : index
    %1 = vector.load %arg1[%c0_1, %c0_2] : memref<4x8xf32, #tpu.memory_space<vmem>>, vector<4x8xf32>
    %cst = arith.constant dense<0.000000e+00> : vector<4x512xf32>
    %2 = tpu.matmul %1, %0, %cst {dimension_numbers = #tpu.dot_dimension_numbers<[1], [0], [0], [1], [0, 0, 1, 1], [], []>} : vector<4x8xf32>, vector<8x512xf32>, vector<4x512xf32> -> vector<4x512xf32>
    %c0_3 = arith.constant 0 : index
    %c0_4 = arith.constant 0 : index
    %3 = vector.load %arg2[%c0_3, %c0_4] : memref<4x2xf32, #tpu.memory_space<vmem>>, vector<4x2xf32>
    %cst_5 = arith.constant dense<0.000000e+00> : vector<4xf32>
    %4 = vector.multi_reduction <add>, %2, %cst_5 [1] : vector<4x512xf32> to vector<4xf32>
    %5 = vector.shape_cast %4 : vector<4xf32> to vector<4x1xf32>
    %6 = arith.mulf %2, %2 : vector<4x512xf32>
    %cst_6 = arith.constant dense<0.000000e+00> : vector<4xf32>
    %7 = vector.multi_reduction <add>, %6, %cst_6 [1] : vector<4x512xf32> to vector<4xf32>
    %8 = vector.shape_cast %7 : vector<4xf32> to vector<4x1xf32>
    %cst_7 = arith.constant 0.001953125 : f32
    %9 = vector.broadcast %cst_7 : f32 to vector<4x1xf32>
    %10 = arith.mulf %5, %9 : vector<4x1xf32>
    %cst_8 = arith.constant 0.001953125 : f32
    %11 = vector.broadcast %cst_8 : f32 to vector<4x1xf32>
    %12 = arith.mulf %8, %11 : vector<4x1xf32>
    %13 = arith.mulf %10, %10 : vector<4x1xf32>
    %14 = arith.subf %12, %13 : vector<4x1xf32>
    %cst_9 = arith.constant 0.000000e+00 : f32
    %15 = vector.broadcast %cst_9 : f32 to vector<4x1xf32>
    %16 = arith.maximumf %14, %15 : vector<4x1xf32>
    %17 = vector.extract_strided_slice %3 {offsets = [0, 0], sizes = [4, 1], strides = [1, 1]} : vector<4x2xf32> to vector<4x1xf32>
    %cst_10 = arith.constant 9.99999974E-6 : f32
    %18 = vector.broadcast %cst_10 : f32 to vector<4x1xf32>
    %19 = arith.addf %16, %18 : vector<4x1xf32>
    %20 = math.rsqrt %19 : vector<4x1xf32>
    %21 = arith.mulf %17, %20 : vector<4x1xf32>
    %22 = vector.extract_strided_slice %3 {offsets = [0, 1], sizes = [4, 1], strides = [1, 1]} : vector<4x2xf32> to vector<4x1xf32>
    %23 = arith.mulf %10, %21 : vector<4x1xf32>
    %24 = arith.subf %22, %23 : vector<4x1xf32>
    %25 = vector.broadcast %21 : vector<4x1xf32> to vector<4x512xf32>
    %26 = arith.mulf %2, %25 : vector<4x512xf32>
    %27 = vector.broadcast %24 : vector<4x1xf32> to vector<4x512xf32>
    %28 = arith.addf %26, %27 : vector<4x512xf32>
    %cst_11 = arith.constant 0.000000e+00 : f32
    %29 = vector.broadcast %cst_11 : f32 to vector<4x512xf32>
    %30 = arith.maximumf %28, %29 : vector<4x512xf32>
    %31 = vector.extract_strided_slice %30 {offsets = [0, 495], sizes = [4, 17], strides = [1, 1]} : vector<4x512xf32> to vector<4x17xf32>
    %32 = vector.extract_strided_slice %30 {offsets = [0, 0], sizes = [4, 495], strides = [1, 1]} : vector<4x512xf32> to vector<4x495xf32>
    %33 = tpu.concatenate %31, %32 in 1 : vector<4x17xf32>, vector<4x495xf32> -> vector<4x512xf32>
    %c0_12 = arith.constant 0 : index
    %c0_13 = arith.constant 0 : index
    %34 = vector.load %arg7[%c0_12, %c0_13] : memref<9x512xf32, #tpu.memory_space<vmem>>, vector<1x512xf32>
    %35 = vector.broadcast %34 : vector<1x512xf32> to vector<4x512xf32>
    %36 = arith.mulf %33, %35 : vector<4x512xf32>
    %37 = vector.extract_strided_slice %30 {offsets = [0, 496], sizes = [4, 16], strides = [1, 1]} : vector<4x512xf32> to vector<4x16xf32>
    %38 = vector.extract_strided_slice %30 {offsets = [0, 0], sizes = [4, 496], strides = [1, 1]} : vector<4x512xf32> to vector<4x496xf32>
    %39 = tpu.concatenate %37, %38 in 1 : vector<4x16xf32>, vector<4x496xf32> -> vector<4x512xf32>
    %c1 = arith.constant 1 : index
    %c0_14 = arith.constant 0 : index
    %40 = vector.load %arg7[%c1, %c0_14] : memref<9x512xf32, #tpu.memory_space<vmem>>, vector<1x512xf32>
    %41 = vector.broadcast %40 : vector<1x512xf32> to vector<4x512xf32>
    %42 = arith.mulf %39, %41 : vector<4x512xf32>
    %43 = vector.extract_strided_slice %30 {offsets = [0, 497], sizes = [4, 15], strides = [1, 1]} : vector<4x512xf32> to vector<4x15xf32>
    %44 = vector.extract_strided_slice %30 {offsets = [0, 0], sizes = [4, 497], strides = [1, 1]} : vector<4x512xf32> to vector<4x497xf32>
    %45 = tpu.concatenate %43, %44 in 1 : vector<4x15xf32>, vector<4x497xf32> -> vector<4x512xf32>
    %c2 = arith.constant 2 : index
    %c0_15 = arith.constant 0 : index
    %46 = vector.load %arg7[%c2, %c0_15] : memref<9x512xf32, #tpu.memory_space<vmem>>, vector<1x512xf32>
    %47 = vector.broadcast %46 : vector<1x512xf32> to vector<4x512xf32>
    %48 = arith.mulf %45, %47 : vector<4x512xf32>
    %49 = vector.extract_strided_slice %30 {offsets = [0, 511], sizes = [4, 1], strides = [1, 1]} : vector<4x512xf32> to vector<4x1xf32>
    %50 = vector.extract_strided_slice %30 {offsets = [0, 0], sizes = [4, 511], strides = [1, 1]} : vector<4x512xf32> to vector<4x511xf32>
    %51 = tpu.concatenate %49, %50 in 1 : vector<4x1xf32>, vector<4x511xf32> -> vector<4x512xf32>
    %c3 = arith.constant 3 : index
    %c0_16 = arith.constant 0 : index
    %52 = vector.load %arg7[%c3, %c0_16] : memref<9x512xf32, #tpu.memory_space<vmem>>, vector<1x512xf32>
    %53 = vector.broadcast %52 : vector<1x512xf32> to vector<4x512xf32>
    %54 = arith.mulf %51, %53 : vector<4x512xf32>
    %55 = vector.extract_strided_slice %30 {offsets = [0, 1], sizes = [4, 511], strides = [1, 1]} : vector<4x512xf32> to vector<4x511xf32>
    %56 = vector.extract_strided_slice %30 {offsets = [0, 0], sizes = [4, 1], strides = [1, 1]} : vector<4x512xf32> to vector<4x1xf32>
    %57 = tpu.concatenate %55, %56 in 1 : vector<4x511xf32>, vector<4x1xf32> -> vector<4x512xf32>
    %c5 = arith.constant 5 : index
    %c0_17 = arith.constant 0 : index
    %58 = vector.load %arg7[%c5, %c0_17] : memref<9x512xf32, #tpu.memory_space<vmem>>, vector<1x512xf32>
    %59 = vector.broadcast %58 : vector<1x512xf32> to vector<4x512xf32>
    %60 = arith.mulf %57, %59 : vector<4x512xf32>
    %61 = vector.extract_strided_slice %30 {offsets = [0, 15], sizes = [4, 497], strides = [1, 1]} : vector<4x512xf32> to vector<4x497xf32>
    %62 = vector.extract_strided_slice %30 {offsets = [0, 0], sizes = [4, 15], strides = [1, 1]} : vector<4x512xf32> to vector<4x15xf32>
    %63 = tpu.concatenate %61, %62 in 1 : vector<4x497xf32>, vector<4x15xf32> -> vector<4x512xf32>
    %c6 = arith.constant 6 : index
    %c0_18 = arith.constant 0 : index
    %64 = vector.load %arg7[%c6, %c0_18] : memref<9x512xf32, #tpu.memory_space<vmem>>, vector<1x512xf32>
    %65 = vector.broadcast %64 : vector<1x512xf32> to vector<4x512xf32>
    %66 = arith.mulf %63, %65 : vector<4x512xf32>
    %67 = vector.extract_strided_slice %30 {offsets = [0, 16], sizes = [4, 496], strides = [1, 1]} : vector<4x512xf32> to vector<4x496xf32>
    %68 = vector.extract_strided_slice %30 {offsets = [0, 0], sizes = [4, 16], strides = [1, 1]} : vector<4x512xf32> to vector<4x16xf32>
    %69 = tpu.concatenate %67, %68 in 1 : vector<4x496xf32>, vector<4x16xf32> -> vector<4x512xf32>
    %c7 = arith.constant 7 : index
    %c0_19 = arith.constant 0 : index
    %70 = vector.load %arg7[%c7, %c0_19] : memref<9x512xf32, #tpu.memory_space<vmem>>, vector<1x512xf32>
    %71 = vector.broadcast %70 : vector<1x512xf32> to vector<4x512xf32>
    %72 = arith.mulf %69, %71 : vector<4x512xf32>
    %73 = vector.extract_strided_slice %30 {offsets = [0, 17], sizes = [4, 495], strides = [1, 1]} : vector<4x512xf32> to vector<4x495xf32>
    %74 = vector.extract_strided_slice %30 {offsets = [0, 0], sizes = [4, 17], strides = [1, 1]} : vector<4x512xf32> to vector<4x17xf32>
    %75 = tpu.concatenate %73, %74 in 1 : vector<4x495xf32>, vector<4x17xf32> -> vector<4x512xf32>
    %c8 = arith.constant 8 : index
    %c0_20 = arith.constant 0 : index
    %76 = vector.load %arg7[%c8, %c0_20] : memref<9x512xf32, #tpu.memory_space<vmem>>, vector<1x512xf32>
    %77 = vector.broadcast %76 : vector<1x512xf32> to vector<4x512xf32>
    %78 = arith.mulf %75, %77 : vector<4x512xf32>
    %79 = tpu.concatenate %36, %42, %48, %54, %30, %60, %66, %72, %78 in 0 : vector<4x512xf32>, vector<4x512xf32>, vector<4x512xf32>, vector<4x512xf32>, vector<4x512xf32>, vector<4x512xf32>, vector<4x512xf32>, vector<4x512xf32>, vector<4x512xf32> -> vector<36x512xf32>
    %c0_21 = arith.constant 0 : index
    %c0_22 = arith.constant 0 : index
    %80 = vector.load %arg3[%c0_21, %c0_22] : memref<4x36xf32, #tpu.memory_space<vmem>>, vector<4x36xf32>
    %cst_23 = arith.constant dense<0.000000e+00> : vector<4x512xf32>
    %81 = tpu.matmul %80, %79, %cst_23 {dimension_numbers = #tpu.dot_dimension_numbers<[1], [0], [0], [1], [0, 0, 1, 1], [], []>} : vector<4x36xf32>, vector<36x512xf32>, vector<4x512xf32> -> vector<4x512xf32>
    %c0_24 = arith.constant 0 : index
    %c0_25 = arith.constant 0 : index
    %82 = vector.load %arg8[%c0_24, %c0_25] : memref<512x128xf32, #tpu.memory_space<vmem>>, vector<512x128xf32>
    %cst_26 = arith.constant dense<0.000000e+00> : vector<4x128xf32>
    %83 = tpu.matmul %81, %82, %cst_26 {dimension_numbers = #tpu.dot_dimension_numbers<[1], [0], [0], [1], [0, 0, 1, 1], [], []>} : vector<4x512xf32>, vector<512x128xf32>, vector<4x128xf32> -> vector<4x128xf32>
    %c0_27 = arith.constant 0 : index
    %c0_28 = arith.constant 0 : index
    %84 = vector.load %arg4[%c0_27, %c0_28] : memref<4x2xf32, #tpu.memory_space<vmem>>, vector<4x2xf32>
    %cst_29 = arith.constant dense<0.000000e+00> : vector<4xf32>
    %85 = vector.multi_reduction <add>, %83, %cst_29 [1] : vector<4x128xf32> to vector<4xf32>
    %86 = vector.shape_cast %85 : vector<4xf32> to vector<4x1xf32>
    %87 = arith.mulf %83, %83 : vector<4x128xf32>
    %cst_30 = arith.constant dense<0.000000e+00> : vector<4xf32>
    %88 = vector.multi_reduction <add>, %87, %cst_30 [1] : vector<4x128xf32> to vector<4xf32>
    %89 = vector.shape_cast %88 : vector<4xf32> to vector<4x1xf32>
    %cst_31 = arith.constant 7.812500e-03 : f32
    %90 = vector.broadcast %cst_31 : f32 to vector<4x1xf32>
    %91 = arith.mulf %86, %90 : vector<4x1xf32>
    %cst_32 = arith.constant 7.812500e-03 : f32
    %92 = vector.broadcast %cst_32 : f32 to vector<4x1xf32>
    %93 = arith.mulf %89, %92 : vector<4x1xf32>
    %94 = arith.mulf %91, %91 : vector<4x1xf32>
    %95 = arith.subf %93, %94 : vector<4x1xf32>
    %cst_33 = arith.constant 0.000000e+00 : f32
    %96 = vector.broadcast %cst_33 : f32 to vector<4x1xf32>
    %97 = arith.maximumf %95, %96 : vector<4x1xf32>
    %98 = vector.extract_strided_slice %84 {offsets = [0, 0], sizes = [4, 1], strides = [1, 1]} : vector<4x2xf32> to vector<4x1xf32>
    %cst_34 = arith.constant 9.99999974E-6 : f32
    %99 = vector.broadcast %cst_34 : f32 to vector<4x1xf32>
    %100 = arith.addf %97, %99 : vector<4x1xf32>
    %101 = math.rsqrt %100 : vector<4x1xf32>
    %102 = arith.mulf %98, %101 : vector<4x1xf32>
    %103 = vector.extract_strided_slice %84 {offsets = [0, 1], sizes = [4, 1], strides = [1, 1]} : vector<4x2xf32> to vector<4x1xf32>
    %104 = arith.mulf %91, %102 : vector<4x1xf32>
    %105 = arith.subf %103, %104 : vector<4x1xf32>
    %106 = vector.broadcast %102 : vector<4x1xf32> to vector<4x128xf32>
    %107 = arith.mulf %83, %106 : vector<4x128xf32>
    %108 = vector.broadcast %105 : vector<4x1xf32> to vector<4x128xf32>
    %109 = arith.addf %107, %108 : vector<4x128xf32>
    %cst_35 = arith.constant 0.000000e+00 : f32
    %110 = vector.broadcast %cst_35 : f32 to vector<4x128xf32>
    %111 = arith.maximumf %109, %110 : vector<4x128xf32>
    %c0_36 = arith.constant 0 : index
    %c0_37 = arith.constant 0 : index
    %112 = vector.load %arg5[%c0_36, %c0_37] : memref<16x4xf32, #tpu.memory_space<vmem>>, vector<16x4xf32>
    %cst_38 = arith.constant dense<0.000000e+00> : vector<16x128xf32>
    %113 = tpu.matmul %112, %111, %cst_38 {dimension_numbers = #tpu.dot_dimension_numbers<[1], [0], [0], [1], [0, 0, 1, 1], [], []>} : vector<16x4xf32>, vector<4x128xf32>, vector<16x128xf32> -> vector<16x128xf32>
    %c0_39 = arith.constant 0 : index
    %c0_40 = arith.constant 0 : index
    %114 = vector.load %arg6[%c0_39, %c0_40] : memref<16x2xf32, #tpu.memory_space<vmem>>, vector<16x2xf32>
    %cst_41 = arith.constant dense<0.000000e+00> : vector<16xf32>
    %115 = vector.multi_reduction <add>, %113, %cst_41 [1] : vector<16x128xf32> to vector<16xf32>
    %116 = vector.shape_cast %115 : vector<16xf32> to vector<16x1xf32>
    %117 = arith.mulf %113, %113 : vector<16x128xf32>
    %cst_42 = arith.constant dense<0.000000e+00> : vector<16xf32>
    %118 = vector.multi_reduction <add>, %117, %cst_42 [1] : vector<16x128xf32> to vector<16xf32>
    %119 = vector.shape_cast %118 : vector<16xf32> to vector<16x1xf32>
    %cst_43 = arith.constant 7.812500e-03 : f32
    %120 = vector.broadcast %cst_43 : f32 to vector<16x1xf32>
    %121 = arith.mulf %116, %120 : vector<16x1xf32>
    %cst_44 = arith.constant 7.812500e-03 : f32
    %122 = vector.broadcast %cst_44 : f32 to vector<16x1xf32>
    %123 = arith.mulf %119, %122 : vector<16x1xf32>
    %124 = arith.mulf %121, %121 : vector<16x1xf32>
    %125 = arith.subf %123, %124 : vector<16x1xf32>
    %cst_45 = arith.constant 0.000000e+00 : f32
    %126 = vector.broadcast %cst_45 : f32 to vector<16x1xf32>
    %127 = arith.maximumf %125, %126 : vector<16x1xf32>
    %128 = vector.extract_strided_slice %114 {offsets = [0, 0], sizes = [16, 1], strides = [1, 1]} : vector<16x2xf32> to vector<16x1xf32>
    %cst_46 = arith.constant 9.99999974E-6 : f32
    %129 = vector.broadcast %cst_46 : f32 to vector<16x1xf32>
    %130 = arith.addf %127, %129 : vector<16x1xf32>
    %131 = math.rsqrt %130 : vector<16x1xf32>
    %132 = arith.mulf %128, %131 : vector<16x1xf32>
    %133 = vector.extract_strided_slice %114 {offsets = [0, 1], sizes = [16, 1], strides = [1, 1]} : vector<16x2xf32> to vector<16x1xf32>
    %134 = arith.mulf %121, %132 : vector<16x1xf32>
    %135 = arith.subf %133, %134 : vector<16x1xf32>
    %136 = vector.broadcast %132 : vector<16x1xf32> to vector<16x128xf32>
    %137 = arith.mulf %113, %136 : vector<16x128xf32>
    %138 = vector.broadcast %135 : vector<16x1xf32> to vector<16x128xf32>
    %139 = arith.addf %137, %138 : vector<16x128xf32>
    %c0_47 = arith.constant 0 : index
    %c0_48 = arith.constant 0 : index
    %140 = vector.load %arg9[%c0_47, %c0_48] : memref<16x128xf32, #tpu.memory_space<vmem>>, vector<16x128xf32>
    %141 = arith.addf %139, %140 : vector<16x128xf32>
    %cst_49 = arith.constant 0.000000e+00 : f32
    %142 = vector.broadcast %cst_49 : f32 to vector<16x128xf32>
    %143 = arith.maximumf %141, %142 : vector<16x128xf32>
    %c0_50 = arith.constant 0 : index
    %c0_51 = arith.constant 0 : index
    %144 = vector.load %arg10[%c0_50, %c0_51] : memref<16x128xf32, #tpu.memory_space<vmem>>, vector<16x128xf32>
    tpu.vector_store %arg10[%c0_50, %c0_51], %143 {strides = array<i32>} : memref<16x128xf32, #tpu.memory_space<vmem>>, vector<16x128xf32>,
    return
  }
}

</mosaic_0001>

<llo_original>
// kernel: bottleneck_forward.1
$region0: #{bottleneck_forward.1}
  #allocation0 [shape = 'u32[]', space=smem, size = 0x4, offset = 0x4, fixed_abs, tag = 'smem constant byte address 0x4 - core index']
  #allocation1 [shape = 'u32[144,128]{1,0:T(1,128)}', space=vmem, size = 0x12000, scoped, tag = 'internal scratch']
  %s0 = inlined_call_operand.vmem [shape: f32[8,512], index: 0, kind: input, shape index: {}]
  %s1 = inlined_call_operand.vmem [shape: f32[4,8], index: 1, kind: input, shape index: {}]
  %s2 = inlined_call_operand.vmem [shape: f32[4,2], index: 2, kind: input, shape index: {}]
  %s3 = inlined_call_operand.vmem [shape: f32[4,36], index: 3, kind: input, shape index: {}]
  %s4 = inlined_call_operand.vmem [shape: f32[4,2], index: 4, kind: input, shape index: {}]
  %s5 = inlined_call_operand.vmem [shape: f32[16,4], index: 5, kind: input, shape index: {}]
  %s6 = inlined_call_operand.vmem [shape: f32[16,2], index: 6, kind: input, shape index: {}]
  %s7 = inlined_call_operand.vmem [shape: f32[9,512], index: 7, kind: input, shape index: {}]
  %s8 = inlined_call_operand.vmem [shape: f32[512,128], index: 8, kind: input, shape index: {}]
  %s9 = inlined_call_operand.vmem [shape: f32[16,128], index: 9, kind: input, shape index: {}]
  %s10 = inlined_call_operand.vmem [shape: f32[16,128], index: 10, kind: output, shape index: {}]
  %s11 = sld [smem:[#allocation0]]
  $region50: #{bottleneck_forward.1} parent=0
    _
  %s13 = ssub.s32 1, %s11
  %s14 = scalar_select 0, %s13, %s11
  // Predicated region
  $region2: #{bottleneck_forward.1} parent=0 // pred_check
    _
  $region3: #{bottleneck_forward.1} parent=0 // pred_check_branch
    %16 = sbr.rel (0) target = $region5
  $region4: #{bottleneck_forward.1} parent=0 // pred_region
    _
  $region5: #{bottleneck_forward.1} parent=0 // pred_fallthru
    _
  // Predicated region
  $region6: #{bottleneck_forward.1} parent=0 // pred_check
    _
  $region7: #{bottleneck_forward.1} parent=0 // pred_check_branch
    %18 = sbr.rel (0) target = $region9
  $region8: #{bottleneck_forward.1} parent=0 // pred_region
    _
  $region9: #{bottleneck_forward.1} parent=0 // pred_fallthru
    _
  // Predicated region
  $region10: #{bottleneck_forward.1} parent=0 // pred_check
    _
  $region11: #{bottleneck_forward.1} parent=0 // pred_check_branch
    %20 = sbr.rel (0) target = $region13
  $region12: #{bottleneck_forward.1} parent=0 // pred_region
    _
  $region13: #{bottleneck_forward.1} parent=0 // pred_fallthru
    _
  // Predicated region
  $region14: #{bottleneck_forward.1} parent=0 // pred_check
    _
  $region15: #{bottleneck_forward.1} parent=0 // pred_check_branch
    %22 = sbr.rel (0) target = $region17
  $region16: #{bottleneck_forward.1} parent=0 // pred_region
    _
  $region17: #{bottleneck_forward.1} parent=0 // pred_fallthru
    _
  // Predicated region
  $region18: #{bottleneck_forward.1} parent=0 // pred_check
    _
  $region19: #{bottleneck_forward.1} parent=0 // pred_check_branch
    %24 = sbr.rel (0) target = $region21
  $region20: #{bottleneck_forward.1} parent=0 // pred_region
    _
  $region21: #{bottleneck_forward.1} parent=0 // pred_fallthru
    _
  // Predicated region
  $region22: #{bottleneck_forward.1} parent=0 // pred_check
    _
  $region23: #{bottleneck_forward.1} parent=0 // pred_check_branch
    %26 = sbr.rel (0) target = $region25
  $region24: #{bottleneck_forward.1} parent=0 // pred_region
    _
  $region25: #{bottleneck_forward.1} parent=0 // pred_fallthru
    _
  // Predicated region
  $region26: #{bottleneck_forward.1} parent=0 // pred_check
    _
  $region27: #{bottleneck_forward.1} parent=0 // pred_check_branch
    %28 = sbr.rel (0) target = $region29
  $region28: #{bottleneck_forward.1} parent=0 // pred_region
    _
  $region29: #{bottleneck_forward.1} parent=0 // pred_fallthru
    _
  // Predicated region
  $region30: #{bottleneck_forward.1} parent=0 // pred_check
    _
  $region31: #{bottleneck_forward.1} parent=0 // pred_check_branch
    %30 = sbr.rel (0) target = $region33
  $region32: #{bottleneck_forward.1} parent=0 // pred_region
    _
  $region33: #{bottleneck_forward.1} parent=0 // pred_fallthru
    _
  // Predicated region
  $region34: #{bottleneck_forward.1} parent=0 // pred_check
    _
  $region35: #{bottleneck_forward.1} parent=0 // pred_check_branch
    %32 = sbr.rel (0) target = $region37
  $region36: #{bottleneck_forward.1} parent=0 // pred_region
    _
  $region37: #{bottleneck_forward.1} parent=0 // pred_fallthru
    _
  // Predicated region
  $region38: #{bottleneck_forward.1} parent=0 // pred_check
    _
  $region39: #{bottleneck_forward.1} parent=0 // pred_check_branch
    %34 = sbr.rel (0) target = $region41
  $region40: #{bottleneck_forward.1} parent=0 // pred_region
    _
  $region41: #{bottleneck_forward.1} parent=0 // pred_fallthru
    _
  %v35 = vld [vmem:[%s0] sm:$0xff]
  %v36 = vld [vmem:[%s0 + $0x8] sm:$0xff]
  %v37 = vld [vmem:[%s0 + $0x10] sm:$0xff]
  %v38 = vld [vmem:[%s0 + $0x18] sm:$0xff]
  %v39 = vld [vmem:[%s1] sm:$0xf]
  %vm40 = vcmask 64512
  %v42 = vsel %vm40, %v39, 0
  %44 = vmatprep.subr.mxu0 %v36
  %45 = vmatpush1.msra.mxu0 %v35
  %46 = vmatprep.subr.mxu0 0.0
  %47 = vmatpush1.msra.mxu0 0.0
  %48 = vmatprep.subr.mxu0 0.0
  %49 = vmatpush1.msra.mxu0 0.0
  %50 = vmatprep.subr.mxu0 0.0
  %51 = vmatpush1.msra.mxu0 0.0
  %52 = vmatprep.subr.mxu0 0.0
  %53 = vmatpush1.msra.mxu0 0.0
  %54 = vmatprep.subr.mxu0 0.0
  %55 = vmatpush1.msra.mxu0 0.0
  %56 = vmatprep.subr.mxu0 0.0
  %57 = vmatpush1.msra.mxu0 0.0
  %58 = vmatprep.subr.mxu0 0.0
  %59 = vmatpush1.msra.mxu0 0.0
  %60 = vmatprep.subr.mxu0 0.0
  %61 = vmatpush1.msra.mxu0 0.0
  %62 = vmatprep.subr.mxu0 0.0
  %63 = vmatpush1.msra.mxu0 0.0
  %64 = vmatprep.subr.mxu0 0.0
  %65 = vmatpush1.msra.mxu0 0.0
  %66 = vmatprep.subr.mxu0 0.0
  %67 = vmatpush1.msra.mxu0 0.0
  %68 = vmatprep.subr.mxu0 0.0
  %69 = vmatpush1.msra.mxu0 0.0
  %70 = vmatprep.subr.mxu0 0.0
  %71 = vmatpush1.msra.mxu0 0.0
  %72 = vmatprep.subr.mxu0 0.0
  %73 = vmatpush1.msra.mxu0 0.0
  %74 = vmatprep.subr.mxu0 0.0
  %75 = vmatpush1.msra.mxu0 0.0
  %76 = vmatprep.subr.mxu0 0.0
  %77 = vmatpush1.msra.mxu0 0.0
  %78 = vmatprep.subr.mxu0 0.0
  %79 = vmatpush1.msra.mxu0 0.0
  %80 = vmatprep.subr.mxu0 0.0
  %81 = vmatpush1.msra.mxu0 0.0
  %82 = vmatprep.subr.mxu0 0.0
  %83 = vmatpush1.msra.mxu0 0.0
  %84 = vmatprep.subr.mxu0 0.0
  %85 = vmatpush1.msra.mxu0 0.0
  %86 = vmatprep.subr.mxu0 0.0
  %87 = vmatpush1.msra.mxu0 0.0
  %88 = vmatprep.subr.mxu0 0.0
  %89 = vmatpush1.msra.mxu0 0.0
  %90 = vmatprep.subr.mxu0 0.0
  %91 = vmatpush1.msra.mxu0 0.0
  %92 = vmatprep.subr.mxu0 0.0
  %93 = vmatpush1.msra.mxu0 0.0
  %94 = vmatprep.subr.mxu0 0.0
  %95 = vmatpush1.msra.mxu0 0.0
  %96 = vmatprep.subr.mxu0 0.0
  %97 = vmatpush1.msra.mxu0 0.0
  %98 = vmatprep.subr.mxu0 0.0
  %99 = vmatpush1.msra.mxu0 0.0
  %100 = vmatprep.subr.mxu0 0.0
  %101 = vmatpush1.msra.mxu0 0.0
  %102 = vmatprep.subr.mxu0 0.0
  %103 = vmatpush1.msra.mxu0 0.0
  %104 = vmatprep.subr.mxu0 0.0
  %105 = vmatpush1.msra.mxu0 0.0
  %106 = vmatprep.subr.mxu0 0.0
  %107 = vmatpush1.msra.mxu0 0.0
  %108 = vmatprep.mubr.f32.mxu0 0.0
  %109 = vmatmul.mubr.f32.gmra.mrb[0].mxu0 %v42
  %v110 = vpop.f32.mrb[0].mxu0
  %v111 = vadd.f32 0.0, %v110
  %v112 = vpop.f32.mrb[0].mxu0
  %v113 = vadd.f32 0.0, %v112
  %114 = vdwg.mxu0
  %115 = vmatprep.subr.mxu0 %v38
  %116 = vmatpush1.msra.mxu0 %v37
  %117 = vmatprep.subr.mxu0 0.0
  %118 = vmatpush1.msra.mxu0 0.0
  %119 = vmatprep.subr.mxu0 0.0
  %120 = vmatpush1.msra.mxu0 0.0
  %121 = vmatprep.subr.mxu0 0.0
  %122 = vmatpush1.msra.mxu0 0.0
  %123 = vmatprep.subr.mxu0 0.0
  %124 = vmatpush1.msra.mxu0 0.0
  %125 = vmatprep.subr.mxu0 0.0
  %126 = vmatpush1.msra.mxu0 0.0
  %127 = vmatprep.subr.mxu0 0.0
  %128 = vmatpush1.msra.mxu0 0.0
  %129 = vmatprep.subr.mxu0 0.0
  %130 = vmatpush1.msra.mxu0 0.0
  %131 = vmatprep.subr.mxu0 0.0
  %132 = vmatpush1.msra.mxu0 0.0
  %133 = vmatprep.subr.mxu0 0.0
  %134 = vmatpush1.msra.mxu0 0.0
  %135 = vmatprep.subr.mxu0 0.0
  %136 = vmatpush1.msra.mxu0 0.0
  %137 = vmatprep.subr.mxu0 0.0
  %138 = vmatpush1.msra.mxu0 0.0
  %139 = vmatprep.subr.mxu0 0.0
  %140 = vmatpush1.msra.mxu0 0.0
  %141 = vmatprep.subr.mxu0 0.0
  %142 = vmatpush1.msra.mxu0 0.0
  %143 = vmatprep.subr.mxu0 0.0
  %144 = vmatpush1.msra.mxu0 0.0
  %145 = vmatprep.subr.mxu0 0.0
  %146 = vmatpush1.msra.mxu0 0.0
  %147 = vmatprep.subr.mxu0 0.0
  %148 = vmatpush1.msra.mxu0 0.0
  %149 = vmatprep.subr.mxu0 0.0
  %150 = vmatpush1.msra.mxu0 0.0
  %151 = vmatprep.subr.mxu0 0.0
  %152 = vmatpush1.msra.mxu0 0.0
  %153 = vmatprep.subr.mxu0 0.0
  %154 = vmatpush1.msra.mxu0 0.0
  %155 = vmatprep.subr.mxu0 0.0
  %156 = vmatpush1.msra.mxu0 0.0
  %157 = vmatprep.subr.mxu0 0.0
  %158 = vmatpush1.msra.mxu0 0.0
  %159 = vmatprep.subr.mxu0 0.0
  %160 = vmatpush1.msra.mxu0 0.0
  %161 = vmatprep.subr.mxu0 0.0
  %162 = vmatpush1.msra.mxu0 0.0
  %163 = vmatprep.subr.mxu0 0.0
  %164 = vmatpush1.msra.mxu0 0.0
  %165 = vmatprep.subr.mxu0 0.0
  %166 = vmatpush1.msra.mxu0 0.0
  %167 = vmatprep.subr.mxu0 0.0
  %168 = vmatpush1.msra.mxu0 0.0
  %169 = vmatprep.subr.mxu0 0.0
  %170 = vmatpush1.msra.mxu0 0.0
  %171 = vmatprep.subr.mxu0 0.0
  %172 = vmatpush1.msra.mxu0 0.0
  %173 = vmatprep.subr.mxu0 0.0
  %174 = vmatpush1.msra.mxu0 0.0
  %175 = vmatprep.subr.mxu0 0.0
  %176 = vmatpush1.msra.mxu0 0.0
  %177 = vmatprep.subr.mxu0 0.0
  %178 = vmatpush1.msra.mxu0 0.0
  %179 = vmatprep.mubr.f32.mxu0 0.0
  %180 = vmatmul.mubr.f32.gmra.mrb[0].mxu0 %v42
  %v181 = vpop.f32.mrb[0].mxu0
  %v182 = vadd.f32 0.0, %v181
  %v183 = vpop.f32.mrb[0].mxu0
  %v184 = vadd.f32 0.0, %v183
  %185 = vdwg.mxu0
  %v186 = vld [vmem:[%s2] sm:$0xf]
  %vm187 = vcmask 1043456
  %v188 = vsel %vm187, %v111, 0.0
  %v189 = vsel %vm187, %v113, 0.0
  %v190 = vadd.f32 %v188, %v189
  %v191 = vsel %vm187, %v182, 0.0
  %v192 = vadd.f32 %v190, %v191
  %v193 = vsel %vm187, %v184, 0.0
  %v194 = vadd.f32 %v192, %v193
  %195 = vadd.xlane.f32.xlu0 %v194
  %v196 = vpop.xlane.xlu0 %195
  %v197 = vmul.f32 %v111, %v111
  %v198 = vmul.f32 %v113, %v113
  %v199 = vmul.f32 %v182, %v182
  %v200 = vmul.f32 %v184, %v184
  %v201 = vsel %vm187, %v197, 0.0
  %v202 = vsel %vm187, %v198, 0.0
  %v203 = vadd.f32 %v201, %v202
  %v204 = vsel %vm187, %v199, 0.0
  %v205 = vadd.f32 %v203, %v204
  %v206 = vsel %vm187, %v200, 0.0
  %v207 = vadd.f32 %v205, %v206
  %208 = vadd.xlane.f32.xlu0 %v207
  %v209 = vpop.xlane.xlu0 %208
  %v210 = vmul.f32 %v196, 0.001953125
  %v211 = vmul.f32 %v209, 0.001953125
  %v212 = vmul.f32 %v210, %v210
  %v213 = vsub.f32 %v211, %v212
  %v214 = vmax.f32 %v213, 0.0
  %v215 = vadd.f32 %v214, 1e-05
  %v216 = vrsqrt.pop %v215
  %v217 = vmul.f32 %v186, %v216
  %v218 = vmul.f32 %v210, %v217
  %220 = vrot.lane.b32.xlu0 %v218, 1
  %v221 = vpop.permute.xlu0 %220
  %v223 = vsub.f32 %v186, %v221
  %225 = vset.pattern.permute.xlu0 0
  %226 = vperm.xlu0 %225, %v217
  %v227 = vpop.permute.xlu0 %226
  %v229 = vmul.f32 %v111, %v227
  %v230 = vmul.f32 %v113, %v227
  %v231 = vmul.f32 %v182, %v227
  %v232 = vmul.f32 %v184, %v227
  %234 = vset.pattern.permute.xlu0 1
  %235 = vperm.xlu0 %234, %v223
  %v236 = vpop.permute.xlu0 %235
  %v238 = vadd.f32 %v229, %v236
  %v239 = vadd.f32 %v230, %v236
  %v240 = vadd.f32 %v231, %v236
  %v241 = vadd.f32 %v232, %v236
  %v242 = vmax.f32 %v238, 0.0
  %v243 = vmax.f32 %v239, 0.0
  %v244 = vmax.f32 %v240, 0.0
  %v245 = vmax.f32 %v241, 0.0
  %247 = vrot.lane.b32.xlu0 %v245, 17
  %v248 = vpop.permute.xlu0 %247
  %253 = vrot.lane.b32.xlu0 %v242, 17
  %v254 = vpop.permute.xlu0 %253
  %255 = vrot.lane.b32.xlu0 %v243, 17
  %v256 = vpop.permute.xlu0 %255
  %257 = vrot.lane.b32.xlu0 %v244, 17
  %v258 = vpop.permute.xlu0 %257
  %vm259 = vcmask 138240
  %v260 = vsel %vm259, %v254, %v256
  %v261 = vsel %vm259, %v256, %v258
  %v262 = vsel %vm259, %v258, %v248
  %v267 = vsel %vm259, %v248, %v254
  %v268 = vld [vmem:[%s7] ss:$8 sm:$0xf]
  %v270 = vlaneseq
  %v271 = vshrl.u32 %v270, 7
  %v272 = vsub.s32 0, %v271
  %v273 = vrot.slane %v268, %v272
  %v274 = vlaneseq
  %v275 = vshrl.u32 %v274, 7
  %v276 = vsub.s32 1, %v275
  %v277 = vrot.slane %v268, %v276
  %v278 = vlaneseq
  %v279 = vshrl.u32 %v278, 7
  %v280 = vsub.s32 2, %v279
  %v281 = vrot.slane %v268, %v280
  %v282 = vlaneseq
  %v283 = vshrl.u32 %v282, 7
  %v284 = vsub.s32 3, %v283
  %v285 = vrot.slane %v268, %v284
  %v290 = vmul.f32 %v267, %v273
  %v291 = vmul.f32 %v260, %v277
  %v292 = vmul.f32 %v261, %v281
  %v293 = vmul.f32 %v262, %v285
  %294 = vrot.lane.b32.xlu0 %v245, 16
  %v295 = vpop.permute.xlu0 %294
  %297 = vrot.lane.b32.xlu0 %v242, 16
  %v298 = vpop.permute.xlu0 %297
  %299 = vrot.lane.b32.xlu0 %v243, 16
  %v300 = vpop.permute.xlu0 %299
  %301 = vrot.lane.b32.xlu0 %v244, 16
  %v302 = vpop.permute.xlu0 %301
  %vm303 = vcmask 130048
  %v304 = vsel %vm303, %v298, %v300
  %v305 = vsel %vm303, %v300, %v302
  %v306 = vsel %vm303, %v302, %v295
  %v311 = vsel %vm303, %v295, %v298
  %s312 = scalar_lea.vmem %s7, 1
  %v313 = vld [vmem:[%s312] ss:$8 sm:$0xf]
  %v315 = vlaneseq
  %v316 = vshrl.u32 %v315, 7
  %v317 = vsub.s32 0, %v316
  %v318 = vrot.slane %v313, %v317
  %v319 = vlaneseq
  %v320 = vshrl.u32 %v319, 7
  %v321 = vsub.s32 1, %v320
  %v322 = vrot.slane %v313, %v321
  %v323 = vlaneseq
  %v324 = vshrl.u32 %v323, 7
  %v325 = vsub.s32 2, %v324
  %v326 = vrot.slane %v313, %v325
  %v327 = vlaneseq
  %v328 = vshrl.u32 %v327, 7
  %v329 = vsub.s32 3, %v328
  %v330 = vrot.slane %v313, %v329
  %v335 = vmul.f32 %v311, %v318
  %v336 = vmul.f32 %v304, %v322
  %v337 = vmul.f32 %v305, %v326
  %v338 = vmul.f32 %v306, %v330
  %339 = vrot.lane.b32.xlu0 %v245, 15
  %v340 = vpop.permute.xlu0 %339
  %342 = vrot.lane.b32.xlu0 %v242, 15
  %v343 = vpop.permute.xlu0 %342
  %344 = vrot.lane.b32.xlu0 %v243, 15
  %v345 = vpop.permute.xlu0 %344
  %346 = vrot.lane.b32.xlu0 %v244, 15
  %v347 = vpop.permute.xlu0 %346
  %vm348 = vcmask 121856
  %v349 = vsel %vm348, %v343, %v345
  %v350 = vsel %vm348, %v345, %v347
  %v351 = vsel %vm348, %v347, %v340
  %v356 = vsel %vm348, %v340, %v343
  %s357 = scalar_lea.vmem %s7, 2
  %v358 = vld [vmem:[%s357] ss:$8 sm:$0xf]
  %v360 = vlaneseq
  %v361 = vshrl.u32 %v360, 7
  %v362 = vsub.s32 0, %v361
  %v363 = vrot.slane %v358, %v362
  %v364 = vlaneseq
  %v365 = vshrl.u32 %v364, 7
  %v366 = vsub.s32 1, %v365
  %v367 = vrot.slane %v358, %v366
  %v368 = vlaneseq
  %v369 = vshrl.u32 %v368, 7
  %v370 = vsub.s32 2, %v369
  %v371 = vrot.slane %v358, %v370
  %v372 = vlaneseq
  %v373 = vshrl.u32 %v372, 7
  %v374 = vsub.s32 3, %v373
  %v375 = vrot.slane %v358, %v374
  %v380 = vmul.f32 %v356, %v363
  %v381 = vmul.f32 %v349, %v367
  %v382 = vmul.f32 %v350, %v371
  %v383 = vmul.f32 %v351, %v375
  %384 = vrot.lane.b32.xlu0 %v245, 1
  %v385 = vpop.permute.xlu0 %384
  %387 = vrot.lane.b32.xlu0 %v242, 1
  %v388 = vpop.permute.xlu0 %387
  %389 = vrot.lane.b32.xlu0 %v243, 1
  %v390 = vpop.permute.xlu0 %389
  %391 = vrot.lane.b32.xlu0 %v244, 1
  %v392 = vpop.permute.xlu0 %391
  %vm393 = vcmask 7168
  %v394 = vsel %vm393, %v388, %v390
  %v395 = vsel %vm393, %v390, %v392
  %v396 = vsel %vm393, %v392, %v385
  %v401 = vsel %vm393, %v385, %v388
  %s402 = scalar_lea.vmem %s7, 3
  %v403 = vld [vmem:[%s402] ss:$8 sm:$0xf]
  %v405 = vlaneseq
  %v406 = vshrl.u32 %v405, 7
  %v407 = vsub.s32 0, %v406
  %v408 = vrot.slane %v403, %v407
  %v409 = vlaneseq
  %v410 = vshrl.u32 %v409, 7
  %v411 = vsub.s32 1, %v410
  %v412 = vrot.slane %v403, %v411
  %v413 = vlaneseq
  %v414 = vshrl.u32 %v413, 7
  %v415 = vsub.s32 2, %v414
  %v416 = vrot.slane %v403, %v415
  %v417 = vlaneseq
  %v418 = vshrl.u32 %v417, 7
  %v419 = vsub.s32 3, %v418
  %v420 = vrot.slane %v403, %v419
  %v425 = vmul.f32 %v401, %v408
  %v426 = vmul.f32 %v394, %v412
  %v427 = vmul.f32 %v395, %v416
  %v428 = vmul.f32 %v396, %v420
  %429 = vrot.lane.b32.xlu0 %v242, 127
  %v430 = vpop.permute.xlu0 %429
  %431 = vrot.lane.b32.xlu0 %v243, 127
  %v432 = vpop.permute.xlu0 %431
  %433 = vrot.lane.b32.xlu0 %v244, 127
  %v434 = vpop.permute.xlu0 %433
  %435 = vrot.lane.b32.xlu0 %v245, 127
  %v436 = vpop.permute.xlu0 %435
  %vm437 = vcmask 1039360
  %v438 = vsel %vm437, %v430, %v432
  %v439 = vsel %vm437, %v432, %v434
  %v440 = vsel %vm437, %v434, %v436
  %v446 = vsel %vm437, %v436, %v430
  %s447 = scalar_lea.vmem %s7, 5
  %v448 = vld [vmem:[%s447] ss:$8 sm:$0xf]
  %v450 = vlaneseq
  %v451 = vshrl.u32 %v450, 7
  %v452 = vsub.s32 0, %v451
  %v453 = vrot.slane %v448, %v452
  %v454 = vlaneseq
  %v455 = vshrl.u32 %v454, 7
  %v456 = vsub.s32 1, %v455
  %v457 = vrot.slane %v448, %v456
  %v458 = vlaneseq
  %v459 = vshrl.u32 %v458, 7
  %v460 = vsub.s32 2, %v459
  %v461 = vrot.slane %v448, %v460
  %v462 = vlaneseq
  %v463 = vshrl.u32 %v462, 7
  %v464 = vsub.s32 3, %v463
  %v465 = vrot.slane %v448, %v464
  %v470 = vmul.f32 %v438, %v453
  %v471 = vmul.f32 %v439, %v457
  %v472 = vmul.f32 %v440, %v461
  %v473 = vmul.f32 %v446, %v465
  %474 = vrot.lane.b32.xlu0 %v242, 113
  %v475 = vpop.permute.xlu0 %474
  %476 = vrot.lane.b32.xlu0 %v243, 113
  %v477 = vpop.permute.xlu0 %476
  %478 = vrot.lane.b32.xlu0 %v244, 113
  %v479 = vpop.permute.xlu0 %478
  %480 = vrot.lane.b32.xlu0 %v245, 113
  %v481 = vpop.permute.xlu0 %480
  %vm482 = vcmask 924672
  %v483 = vsel %vm482, %v475, %v477
  %v484 = vsel %vm482, %v477, %v479
  %v485 = vsel %vm482, %v479, %v481
  %v491 = vsel %vm482, %v481, %v475
  %s492 = scalar_lea.vmem %s7, 6
  %v493 = vld [vmem:[%s492] ss:$8 sm:$0xf]
  %v495 = vlaneseq
  %v496 = vshrl.u32 %v495, 7
  %v497 = vsub.s32 0, %v496
  %v498 = vrot.slane %v493, %v497
  %v499 = vlaneseq
  %v500 = vshrl.u32 %v499, 7
  %v501 = vsub.s32 1, %v500
  %v502 = vrot.slane %v493, %v501
  %v503 = vlaneseq
  %v504 = vshrl.u32 %v503, 7
  %v505 = vsub.s32 2, %v504
  %v506 = vrot.slane %v493, %v505
  %v507 = vlaneseq
  %v508 = vshrl.u32 %v507, 7
  %v509 = vsub.s32 3, %v508
  %v510 = vrot.slane %v493, %v509
  %v515 = vmul.f32 %v483, %v498
  %v516 = vmul.f32 %v484, %v502
  %v517 = vmul.f32 %v485, %v506
  %v518 = vmul.f32 %v491, %v510
  %519 = vrot.lane.b32.xlu0 %v242, 112
  %v520 = vpop.permute.xlu0 %519
  %521 = vrot.lane.b32.xlu0 %v243, 112
  %v522 = vpop.permute.xlu0 %521
  %523 = vrot.lane.b32.xlu0 %v244, 112
  %v524 = vpop.permute.xlu0 %523
  %525 = vrot.lane.b32.xlu0 %v245, 112
  %v526 = vpop.permute.xlu0 %525
  %vm527 = vcmask 916480
  %v528 = vsel %vm527, %v520, %v522
  %v529 = vsel %vm527, %v522, %v524
  %v530 = vsel %vm527, %v524, %v526
  %v536 = vsel %vm527, %v526, %v520
  %s537 = scalar_lea.vmem %s7, 7
  %v538 = vld [vmem:[%s537] ss:$8 sm:$0xf]
  %v540 = vlaneseq
  %v541 = vshrl.u32 %v540, 7
  %v542 = vsub.s32 0, %v541
  %v543 = vrot.slane %v538, %v542
  %v544 = vlaneseq
  %v545 = vshrl.u32 %v544, 7
  %v546 = vsub.s32 1, %v545
  %v547 = vrot.slane %v538, %v546
  %v548 = vlaneseq
  %v549 = vshrl.u32 %v548, 7
  %v550 = vsub.s32 2, %v549
  %v551 = vrot.slane %v538, %v550
  %v552 = vlaneseq
  %v553 = vshrl.u32 %v552, 7
  %v554 = vsub.s32 3, %v553
  %v555 = vrot.slane %v538, %v554
  %v560 = vmul.f32 %v528, %v543
  %v561 = vmul.f32 %v529, %v547
  %v562 = vmul.f32 %v530, %v551
  %v563 = vmul.f32 %v536, %v555
  %564 = vrot.lane.b32.xlu0 %v242, 111
  %v565 = vpop.permute.xlu0 %564
  %566 = vrot.lane.b32.xlu0 %v243, 111
  %v567 = vpop.permute.xlu0 %566
  %568 = vrot.lane.b32.xlu0 %v244, 111
  %v569 = vpop.permute.xlu0 %568
  %570 = vrot.lane.b32.xlu0 %v245, 111
  %v571 = vpop.permute.xlu0 %570
  %vm572 = vcmask 908288
  %v573 = vsel %vm572, %v565, %v567
  %v574 = vsel %vm572, %v567, %v569
  %v575 = vsel %vm572, %v569, %v571
  %v581 = vsel %vm572, %v571, %v565
  %s582 = scalar_lea.vmem %s7, 32
  %v583 = vld [vmem:[%s582] ss:$8 sm:$0xf]
  %v585 = vlaneseq
  %v586 = vshrl.u32 %v585, 7
  %v587 = vsub.s32 0, %v586
  %v588 = vrot.slane %v583, %v587
  %v589 = vlaneseq
  %v590 = vshrl.u32 %v589, 7
  %v591 = vsub.s32 1, %v590
  %v592 = vrot.slane %v583, %v591
  %v593 = vlaneseq
  %v594 = vshrl.u32 %v593, 7
  %v595 = vsub.s32 2, %v594
  %v596 = vrot.slane %v583, %v595
  %v597 = vlaneseq
  %v598 = vshrl.u32 %v597, 7
  %v599 = vsub.s32 3, %v598
  %v600 = vrot.slane %v583, %v599
  %v605 = vmul.f32 %v573, %v588
  %v606 = vmul.f32 %v574, %v592
  %v607 = vmul.f32 %v575, %v596
  %v608 = vmul.f32 %v581, %v600
  %v613 = vrot.slane %v335, 4
  %v614 = vrot.slane %v336, 4
  %v615 = vrot.slane %v337, 4
  %v616 = vrot.slane %v338, 4
  %v625 = vrot.slane %v425, 4
  %v626 = vrot.slane %v426, 4
  %v627 = vrot.slane %v427, 4
  %v628 = vrot.slane %v428, 4
  %v637 = vrot.slane %v470, 4
  %v638 = vrot.slane %v471, 4
  %v639 = vrot.slane %v472, 4
  %v640 = vrot.slane %v473, 4
  %v649 = vrot.slane %v560, 4
  %v650 = vrot.slane %v561, 4
  %v651 = vrot.slane %v562, 4
  %v652 = vrot.slane %v563, 4
  %v657 = vsel %vm187, %v290, %v613
  %v658 = vsel %vm187, %v291, %v614
  %v659 = vsel %vm187, %v292, %v615
  %v660 = vsel %vm187, %v293, %v616
  %v661 = vsel %vm187, %v380, %v625
  %v662 = vsel %vm187, %v381, %v626
  %v663 = vsel %vm187, %v382, %v627
  %v664 = vsel %vm187, %v383, %v628
  %v665 = vsel %vm187, %v242, %v637
  %v666 = vsel %vm187, %v243, %v638
  %v667 = vsel %vm187, %v244, %v639
  %v668 = vsel %vm187, %v245, %v640
  %v669 = vsel %vm187, %v515, %v649
  %v670 = vsel %vm187, %v516, %v650
  %v671 = vsel %vm187, %v517, %v651
  %v672 = vsel %vm187, %v518, %v652
  %v673 = vld [vmem:[%s3] sm:$0xf]
  %vm674 = vcmask 293888
  %v676 = vsel %vm674, %v673, 0
  %v679 = vsel %vm187, %v605, 0
  %v682 = vsel %vm187, %v606, 0
  %v685 = vsel %vm187, %v607, 0
  %v688 = vsel %vm187, %v608, 0
  %690 = vmatprep.subr.mxu0 %v658
  %691 = vmatpush1.msra.mxu0 %v657
  %692 = vmatprep.subr.mxu0 %v662
  %693 = vmatpush1.msra.mxu0 %v661
  %694 = vmatprep.subr.mxu0 %v666
  %695 = vmatpush1.msra.mxu0 %v665
  %696 = vmatprep.subr.mxu0 %v670
  %697 = vmatpush1.msra.mxu0 %v669
  %698 = vmatprep.subr.mxu0 %v682
  %699 = vmatpush1.msra.mxu0 %v679
  %700 = vmatprep.subr.mxu0 0.0
  %701 = vmatpush1.msra.mxu0 0.0
  %702 = vmatprep.subr.mxu0 0.0
  %703 = vmatpush1.msra.mxu0 0.0
  %704 = vmatprep.subr.mxu0 0.0
  %705 = vmatpush1.msra.mxu0 0.0
  %706 = vmatprep.subr.mxu0 0.0
  %707 = vmatpush1.msra.mxu0 0.0
  %708 = vmatprep.subr.mxu0 0.0
  %709 = vmatpush1.msra.mxu0 0.0
  %710 = vmatprep.subr.mxu0 0.0
  %711 = vmatpush1.msra.mxu0 0.0
  %712 = vmatprep.subr.mxu0 0.0
  %713 = vmatpush1.msra.mxu0 0.0
  %714 = vmatprep.subr.mxu0 0.0
  %715 = vmatpush1.msra.mxu0 0.0
  %716 = vmatprep.subr.mxu0 0.0
  %717 = vmatpush1.msra.mxu0 0.0
  %718 = vmatprep.subr.mxu0 0.0
  %719 = vmatpush1.msra.mxu0 0.0
  %720 = vmatprep.subr.mxu0 0.0
  %721 = vmatpush1.msra.mxu0 0.0
  %722 = vmatprep.subr.mxu0 0.0
  %723 = vmatpush1.msra.mxu0 0.0
  %724 = vmatprep.subr.mxu0 0.0
  %725 = vmatpush1.msra.mxu0 0.0
  %726 = vmatprep.subr.mxu0 0.0
  %727 = vmatpush1.msra.mxu0 0.0
  %728 = vmatprep.subr.mxu0 0.0
  %729 = vmatpush1.msra.mxu0 0.0
  %730 = vmatprep.subr.mxu0 0.0
  %731 = vmatpush1.msra.mxu0 0.0
  %732 = vmatprep.subr.mxu0 0.0
  %733 = vmatpush1.msra.mxu0 0.0
  %734 = vmatprep.subr.mxu0 0.0
  %735 = vmatpush1.msra.mxu0 0.0
  %736 = vmatprep.subr.mxu0 0.0
  %737 = vmatpush1.msra.mxu0 0.0
  %738 = vmatprep.subr.mxu0 0.0
  %739 = vmatpush1.msra.mxu0 0.0
  %740 = vmatprep.subr.mxu0 0.0
  %741 = vmatpush1.msra.mxu0 0.0
  %742 = vmatprep.subr.mxu0 0.0
  %743 = vmatpush1.msra.mxu0 0.0
  %744 = vmatprep.subr.mxu0 0.0
  %745 = vmatpush1.msra.mxu0 0.0
  %746 = vmatprep.subr.mxu0 0.0
  %747 = vmatpush1.msra.mxu0 0.0
  %748 = vmatprep.subr.mxu0 0.0
  %749 = vmatpush1.msra.mxu0 0.0
  %750 = vmatprep.subr.mxu0 0.0
  %751 = vmatpush1.msra.mxu0 0.0
  %752 = vmatprep.subr.mxu0 0.0
  %753 = vmatpush1.msra.mxu0 0.0
  %754 = vmatprep.mubr.f32.mxu0 0.0
  %755 = vmatmul.mubr.f32.gmra.mrb[0].mxu0 %v676
  %v756 = vpop.f32.mrb[0].mxu0
  %v757 = vadd.f32 0.0, %v756
  %v758 = vpop.f32.mrb[0].mxu0
  %v759 = vadd.f32 0.0, %v758
  %760 = vdwg.mxu0
  %761 = vmatprep.subr.mxu0 %v660
  %762 = vmatpush1.msra.mxu0 %v659
  %763 = vmatprep.subr.mxu0 %v664
  %764 = vmatpush1.msra.mxu0 %v663
  %765 = vmatprep.subr.mxu0 %v668
  %766 = vmatpush1.msra.mxu0 %v667
  %767 = vmatprep.subr.mxu0 %v672
  %768 = vmatpush1.msra.mxu0 %v671
  %769 = vmatprep.subr.mxu0 %v688
  %770 = vmatpush1.msra.mxu0 %v685
  %771 = vmatprep.subr.mxu0 0.0
  %772 = vmatpush1.msra.mxu0 0.0
  %773 = vmatprep.subr.mxu0 0.0
  %774 = vmatpush1.msra.mxu0 0.0
  %775 = vmatprep.subr.mxu0 0.0
  %776 = vmatpush1.msra.mxu0 0.0
  %777 = vmatprep.subr.mxu0 0.0
  %778 = vmatpush1.msra.mxu0 0.0
  %779 = vmatprep.subr.mxu0 0.0
  %780 = vmatpush1.msra.mxu0 0.0
  %781 = vmatprep.subr.mxu0 0.0
  %782 = vmatpush1.msra.mxu0 0.0
  %783 = vmatprep.subr.mxu0 0.0
  %784 = vmatpush1.msra.mxu0 0.0
  %785 = vmatprep.subr.mxu0 0.0
  %786 = vmatpush1.msra.mxu0 0.0
  %787 = vmatprep.subr.mxu0 0.0
  %788 = vmatpush1.msra.mxu0 0.0
  %789 = vmatprep.subr.mxu0 0.0
  %790 = vmatpush1.msra.mxu0 0.0
  %791 = vmatprep.subr.mxu0 0.0
  %792 = vmatpush1.msra.mxu0 0.0
  %793 = vmatprep.subr.mxu0 0.0
  %794 = vmatpush1.msra.mxu0 0.0
  %795 = vmatprep.subr.mxu0 0.0
  %796 = vmatpush1.msra.mxu0 0.0
  %797 = vmatprep.subr.mxu0 0.0
  %798 = vmatpush1.msra.mxu0 0.0
  %799 = vmatprep.subr.mxu0 0.0
  %800 = vmatpush1.msra.mxu0 0.0
  %801 = vmatprep.subr.mxu0 0.0
  %802 = vmatpush1.msra.mxu0 0.0
  %803 = vmatprep.subr.mxu0 0.0
  %804 = vmatpush1.msra.mxu0 0.0
  %805 = vmatprep.subr.mxu0 0.0
  %806 = vmatpush1.msra.mxu0 0.0
  %807 = vmatprep.subr.mxu0 0.0
  %808 = vmatpush1.msra.mxu0 0.0
  %809 = vmatprep.subr.mxu0 0.0
  %810 = vmatpush1.msra.mxu0 0.0
  %811 = vmatprep.subr.mxu0 0.0
  %812 = vmatpush1.msra.mxu0 0.0
  %813 = vmatprep.subr.mxu0 0.0
  %814 = vmatpush1.msra.mxu0 0.0
  %815 = vmatprep.subr.mxu0 0.0
  %816 = vmatpush1.msra.mxu0 0.0
  %817 = vmatprep.subr.mxu0 0.0
  %818 = vmatpush1.msra.mxu0 0.0
  %819 = vmatprep.subr.mxu0 0.0
  %820 = vmatpush1.msra.mxu0 0.0
  %821 = vmatprep.subr.mxu0 0.0
  %822 = vmatpush1.msra.mxu0 0.0
  %823 = vmatprep.subr.mxu0 0.0
  %824 = vmatpush1.msra.mxu0 0.0
  %825 = vmatprep.mubr.f32.mxu0 0.0
  %826 = vmatmul.mubr.f32.gmra.mrb[0].mxu0 %v676
  %v827 = vpop.f32.mrb[0].mxu0
  %v828 = vadd.f32 0.0, %v827
  %v829 = vpop.f32.mrb[0].mxu0
  %v830 = vadd.f32 0.0, %v829
  %831 = vdwg.mxu0
  %v832 = vld [vmem:[%s8] sm:$0xff]
  %v833 = vld [vmem:[%s8 + $0x8] sm:$0xff]
  %v834 = vld [vmem:[%s8 + $0x10] sm:$0xff]
  %v835 = vld [vmem:[%s8 + $0x18] sm:$0xff]
  %v836 = vld [vmem:[%s8 + $0x20] sm:$0xff]
  %v837 = vld [vmem:[%s8 + $0x28] sm:$0xff]
  %v838 = vld [vmem:[%s8 + $0x30] sm:$0xff]
  %v839 = vld [vmem:[%s8 + $0x38] sm:$0xff]
  %v840 = vld [vmem:[%s8 + $0x40] sm:$0xff]
  %v841 = vld [vmem:[%s8 + $0x48] sm:$0xff]
  %v842 = vld [vmem:[%s8 + $0x50] sm:$0xff]
  %v843 = vld [vmem:[%s8 + $0x58] sm:$0xff]
  %v844 = vld [vmem:[%s8 + $0x60] sm:$0xff]
  %v845 = vld [vmem:[%s8 + $0x68] sm:$0xff]
  %v846 = vld [vmem:[%s8 + $0x70] sm:$0xff]
  %v847 = vld [vmem:[%s8 + $0x78] sm:$0xff]
  %v848 = vld [vmem:[%s8 + $0x80] sm:$0xff]
  %v849 = vld [vmem:[%s8 + $0x88] sm:$0xff]
  %v850 = vld [vmem:[%s8 + $0x90] sm:$0xff]
  %v851 = vld [vmem:[%s8 + $0x98] sm:$0xff]
  %v852 = vld [vmem:[%s8 + $0xa0] sm:$0xff]
  %v853 = vld [vmem:[%s8 + $0xa8] sm:$0xff]
  %v854 = vld [vmem:[%s8 + $0xb0] sm:$0xff]
  %v855 = vld [vmem:[%s8 + $0xb8] sm:$0xff]
  %v856 = vld [vmem:[%s8 + $0xc0] sm:$0xff]
  %v857 = vld [vmem:[%s8 + $0xc8] sm:$0xff]
  %v858 = vld [vmem:[%s8 + $0xd0] sm:$0xff]
  %v859 = vld [vmem:[%s8 + $0xd8] sm:$0xff]
  %v860 = vld [vmem:[%s8 + $0xe0] sm:$0xff]
  %v861 = vld [vmem:[%s8 + $0xe8] sm:$0xff]
  %v862 = vld [vmem:[%s8 + $0xf0] sm:$0xff]
  %v863 = vld [vmem:[%s8 + $0xf8] sm:$0xff]
  %v864 = vld [vmem:[%s8 + $0x100] sm:$0xff]
  %v865 = vld [vmem:[%s8 + $0x108] sm:$0xff]
  %v866 = vld [vmem:[%s8 + $0x110] sm:$0xff]
  %v867 = vld [vmem:[%s8 + $0x118] sm:$0xff]
  %v868 = vld [vmem:[%s8 + $0x120] sm:$0xff]
  %v869 = vld [vmem:[%s8 + $0x128] sm:$0xff]
  %v870 = vld [vmem:[%s8 + $0x130] sm:$0xff]
  %v871 = vld [vmem:[%s8 + $0x138] sm:$0xff]
  %v872 = vld [vmem:[%s8 + $0x140] sm:$0xff]
  %v873 = vld [vmem:[%s8 + $0x148] sm:$0xff]
  %v874 = vld [vmem:[%s8 + $0x150] sm:$0xff]
  %v875 = vld [vmem:[%s8 + $0x158] sm:$0xff]
  %v876 = vld [vmem:[%s8 + $0x160] sm:$0xff]
  %v877 = vld [vmem:[%s8 + $0x168] sm:$0xff]
  %v878 = vld [vmem:[%s8 + $0x170] sm:$0xff]
  %v879 = vld [vmem:[%s8 + $0x178] sm:$0xff]
  %v880 = vld [vmem:[%s8 + $0x180] sm:$0xff]
  %v881 = vld [vmem:[%s8 + $0x188] sm:$0xff]
  %v882 = vld [vmem:[%s8 + $0x190] sm:$0xff]
  %v883 = vld [vmem:[%s8 + $0x198] sm:$0xff]
  %v884 = vld [vmem:[%s8 + $0x1a0] sm:$0xff]
  %v885 = vld [vmem:[%s8 + $0x1a8] sm:$0xff]
  %v886 = vld [vmem:[%s8 + $0x1b0] sm:$0xff]
  %v887 = vld [vmem:[%s8 + $0x1b8] sm:$0xff]
  %v888 = vld [vmem:[%s8 + $0x1c0] sm:$0xff]
  %v889 = vld [vmem:[%s8 + $0x1c8] sm:$0xff]
  %v890 = vld [vmem:[%s8 + $0x1d0] sm:$0xff]
  %v891 = vld [vmem:[%s8 + $0x1d8] sm:$0xff]
  %v892 = vld [vmem:[%s8 + $0x1e0] sm:$0xff]
  %v893 = vld [vmem:[%s8 + $0x1e8] sm:$0xff]
  %v894 = vld [vmem:[%s8 + $0x1f0] sm:$0xff]
  %v895 = vld [vmem:[%s8 + $0x1f8] sm:$0xff]
  %896 = vmatprep.subr.mxu0 0.0
  %897 = vmatpush1.msra.mxu0 %v832
  %898 = vmatprep.subr.mxu0 0.0
  %899 = vmatpush1.msra.mxu0 %v833
  %900 = vmatprep.subr.mxu0 0.0
  %901 = vmatpush1.msra.mxu0 %v834
  %902 = vmatprep.subr.mxu0 0.0
  %903 = vmatpush1.msra.mxu0 %v835
  %904 = vmatprep.subr.mxu0 0.0
  %905 = vmatpush1.msra.mxu0 %v836
  %906 = vmatprep.subr.mxu0 0.0
  %907 = vmatpush1.msra.mxu0 %v837
  %908 = vmatprep.subr.mxu0 0.0
  %909 = vmatpush1.msra.mxu0 %v838
  %910 = vmatprep.subr.mxu0 0.0
  %911 = vmatpush1.msra.mxu0 %v839
  %912 = vmatprep.subr.mxu0 0.0
  %913 = vmatpush1.msra.mxu0 %v840
  %914 = vmatprep.subr.mxu0 0.0
  %915 = vmatpush1.msra.mxu0 %v841
  %916 = vmatprep.subr.mxu0 0.0
  %917 = vmatpush1.msra.mxu0 %v842
  %918 = vmatprep.subr.mxu0 0.0
  %919 = vmatpush1.msra.mxu0 %v843
  %920 = vmatprep.subr.mxu0 0.0
  %921 = vmatpush1.msra.mxu0 %v844
  %922 = vmatprep.subr.mxu0 0.0
  %923 = vmatpush1.msra.mxu0 %v845
  %924 = vmatprep.subr.mxu0 0.0
  %925 = vmatpush1.msra.mxu0 %v846
  %926 = vmatprep.subr.mxu0 0.0
  %927 = vmatpush1.msra.mxu0 %v847
  %928 = vmatprep.subr.mxu0 0.0
  %929 = vmatpush1.msra.mxu0 %v848
  %930 = vmatprep.subr.mxu0 0.0
  %931 = vmatpush1.msra.mxu0 %v849
  %932 = vmatprep.subr.mxu0 0.0
  %933 = vmatpush1.msra.mxu0 %v850
  %934 = vmatprep.subr.mxu0 0.0
  %935 = vmatpush1.msra.mxu0 %v851
  %936 = vmatprep.subr.mxu0 0.0
  %937 = vmatpush1.msra.mxu0 %v852
  %938 = vmatprep.subr.mxu0 0.0
  %939 = vmatpush1.msra.mxu0 %v853
  %940 = vmatprep.subr.mxu0 0.0
  %941 = vmatpush1.msra.mxu0 %v854
  %942 = vmatprep.subr.mxu0 0.0
  %943 = vmatpush1.msra.mxu0 %v855
  %944 = vmatprep.subr.mxu0 0.0
  %945 = vmatpush1.msra.mxu0 %v856
  %946 = vmatprep.subr.mxu0 0.0
  %947 = vmatpush1.msra.mxu0 %v857
  %948 = vmatprep.subr.mxu0 0.0
  %949 = vmatpush1.msra.mxu0 %v858
  %950 = vmatprep.subr.mxu0 0.0
  %951 = vmatpush1.msra.mxu0 %v859
  %952 = vmatprep.subr.mxu0 0.0
  %953 = vmatpush1.msra.mxu0 %v860
  %954 = vmatprep.subr.mxu0 0.0
  %955 = vmatpush1.msra.mxu0 %v861
  %956 = vmatprep.subr.mxu0 0.0
  %957 = vmatpush1.msra.mxu0 %v862
  %958 = vmatprep.subr.mxu0 0.0
  %959 = vmatpush1.msra.mxu0 %v863
  %960 = vmatprep.mubr.f32.mxu0 %v759
  %961 = vmatmul.mubr.f32.gmra.mrb[0].mxu0 %v757
  %v962 = vpop.f32.mrb[0].mxu0
  %v963 = vadd.f32 0.0, %v962
  %v964 = vpop.f32.mrb[0].mxu0
  %965 = vdwg.mxu0
  %966 = vmatprep.subr.mxu0 0.0
  %967 = vmatpush1.msra.mxu0 %v864
  %968 = vmatprep.subr.mxu0 0.0
  %969 = vmatpush1.msra.mxu0 %v865
  %970 = vmatprep.subr.mxu0 0.0
  %971 = vmatpush1.msra.mxu0 %v866
  %972 = vmatprep.subr.mxu0 0.0
  %973 = vmatpush1.msra.mxu0 %v867
  %974 = vmatprep.subr.mxu0 0.0
  %975 = vmatpush1.msra.mxu0 %v868
  %976 = vmatprep.subr.mxu0 0.0
  %977 = vmatpush1.msra.mxu0 %v869
  %978 = vmatprep.subr.mxu0 0.0
  %979 = vmatpush1.msra.mxu0 %v870
  %980 = vmatprep.subr.mxu0 0.0
  %981 = vmatpush1.msra.mxu0 %v871
  %982 = vmatprep.subr.mxu0 0.0
  %983 = vmatpush1.msra.mxu0 %v872
  %984 = vmatprep.subr.mxu0 0.0
  %985 = vmatpush1.msra.mxu0 %v873
  %986 = vmatprep.subr.mxu0 0.0
  %987 = vmatpush1.msra.mxu0 %v874
  %988 = vmatprep.subr.mxu0 0.0
  %989 = vmatpush1.msra.mxu0 %v875
  %990 = vmatprep.subr.mxu0 0.0
  %991 = vmatpush1.msra.mxu0 %v876
  %992 = vmatprep.subr.mxu0 0.0
  %993 = vmatpush1.msra.mxu0 %v877
  %994 = vmatprep.subr.mxu0 0.0
  %995 = vmatpush1.msra.mxu0 %v878
  %996 = vmatprep.subr.mxu0 0.0
  %997 = vmatpush1.msra.mxu0 %v879
  %998 = vmatprep.subr.mxu0 0.0
  %999 = vmatpush1.msra.mxu0 %v880
  %1000 = vmatprep.subr.mxu0 0.0
  %1001 = vmatpush1.msra.mxu0 %v881
  %1002 = vmatprep.subr.mxu0 0.0
  %1003 = vmatpush1.msra.mxu0 %v882
  %1004 = vmatprep.subr.mxu0 0.0
  %1005 = vmatpush1.msra.mxu0 %v883
  %1006 = vmatprep.subr.mxu0 0.0
  %1007 = vmatpush1.msra.mxu0 %v884
  %1008 = vmatprep.subr.mxu0 0.0
  %1009 = vmatpush1.msra.mxu0 %v885
  %1010 = vmatprep.subr.mxu0 0.0
  %1011 = vmatpush1.msra.mxu0 %v886
  %1012 = vmatprep.subr.mxu0 0.0
  %1013 = vmatpush1.msra.mxu0 %v887
  %1014 = vmatprep.subr.mxu0 0.0
  %1015 = vmatpush1.msra.mxu0 %v888
  %1016 = vmatprep.subr.mxu0 0.0
  %1017 = vmatpush1.msra.mxu0 %v889
  %1018 = vmatprep.subr.mxu0 0.0
  %1019 = vmatpush1.msra.mxu0 %v890
  %1020 = vmatprep.subr.mxu0 0.0
  %1021 = vmatpush1.msra.mxu0 %v891
  %1022 = vmatprep.subr.mxu0 0.0
  %1023 = vmatpush1.msra.mxu0 %v892
  %1024 = vmatprep.subr.mxu0 0.0
  %1025 = vmatpush1.msra.mxu0 %v893
  %1026 = vmatprep.subr.mxu0 0.0
  %1027 = vmatpush1.msra.mxu0 %v894
  %1028 = vmatprep.subr.mxu0 0.0
  %1029 = vmatpush1.msra.mxu0 %v895
  %1030 = vmatprep.mubr.f32.mxu0 %v830
  %1031 = vmatmul.mubr.f32.gmra.mrb[0].mxu0 %v828
  %v1032 = vpop.f32.mrb[0].mxu0
  %v1033 = vadd.f32 %v963, %v1032
  %v1034 = vpop.f32.mrb[0].mxu0
  %1035 = vdwg.mxu0
  %v1036 = vld [vmem:[%s4] sm:$0xf]
  %v1037 = vsel %vm187, %v1033, 0.0
  %1038 = vadd.xlane.f32.xlu0 %v1037
  %v1039 = vpop.xlane.xlu0 %1038
  %v1040 = vmul.f32 %v1033, %v1033
  %v1041 = vsel %vm187, %v1040, 0.0
  %1042 = vadd.xlane.f32.xlu0 %v1041
  %v1043 = vpop.xlane.xlu0 %1042
  %v1044 = vmul.f32 %v1039, 0.0078125
  %v1045 = vmul.f32 %v1043, 0.0078125
  %v1046 = vmul.f32 %v1044, %v1044
  %v1047 = vsub.f32 %v1045, %v1046
  %v1048 = vmax.f32 %v1047, 0.0
  %v1049 = vadd.f32 %v1048, 1e-05
  %v1050 = vrsqrt.pop %v1049
  %v1051 = vmul.f32 %v1036, %v1050
  %v1052 = vmul.f32 %v1044, %v1051
  %1054 = vrot.lane.b32.xlu0 %v1052, 1
  %v1055 = vpop.permute.xlu0 %1054
  %v1057 = vsub.f32 %v1036, %v1055
  %1059 = vset.pattern.permute.xlu0 0
  %1060 = vperm.xlu0 %1059, %v1051
  %v1061 = vpop.permute.xlu0 %1060
  %v1063 = vmul.f32 %v1033, %v1061
  %1065 = vset.pattern.permute.xlu0 1
  %1066 = vperm.xlu0 %1065, %v1057
  %v1067 = vpop.permute.xlu0 %1066
  %v1069 = vadd.f32 %v1063, %v1067
  %v1070 = vmax.f32 %v1069, 0.0
  %v1071 = vld [vmem:[%s5] sm:$0xff]
  %v1072 = vld [vmem:[%s5 + $0x8] sm:$0xff]
  %vm1073 = vcmask 31744
  %v1075 = vsel %vm1073, %v1071, 0
  %v1078 = vsel %vm1073, %v1072, 0
  %v1081 = vsel %vm187, %v1070, 0
  %1083 = vmatprep.subr.mxu0 0.0
  %1084 = vmatpush1.msra.mxu0 %v1081
  %1085 = vmatprep.subr.mxu0 0.0
  %1086 = vmatpush1.msra.mxu0 0.0
  %1087 = vmatprep.subr.mxu0 0.0
  %1088 = vmatpush1.msra.mxu0 0.0
  %1089 = vmatprep.subr.mxu0 0.0
  %1090 = vmatpush1.msra.mxu0 0.0
  %1091 = vmatprep.subr.mxu0 0.0
  %1092 = vmatpush1.msra.mxu0 0.0
  %1093 = vmatprep.subr.mxu0 0.0
  %1094 = vmatpush1.msra.mxu0 0.0
  %1095 = vmatprep.subr.mxu0 0.0
  %1096 = vmatpush1.msra.mxu0 0.0
  %1097 = vmatprep.subr.mxu0 0.0
  %1098 = vmatpush1.msra.mxu0 0.0
  %1099 = vmatprep.subr.mxu0 0.0
  %1100 = vmatpush1.msra.mxu0 0.0
  %1101 = vmatprep.subr.mxu0 0.0
  %1102 = vmatpush1.msra.mxu0 0.0
  %1103 = vmatprep.subr.mxu0 0.0
  %1104 = vmatpush1.msra.mxu0 0.0
  %1105 = vmatprep.subr.mxu0 0.0
  %1106 = vmatpush1.msra.mxu0 0.0
  %1107 = vmatprep.subr.mxu0 0.0
  %1108 = vmatpush1.msra.mxu0 0.0
  %1109 = vmatprep.subr.mxu0 0.0
  %1110 = vmatpush1.msra.mxu0 0.0
  %1111 = vmatprep.subr.mxu0 0.0
  %1112 = vmatpush1.msra.mxu0 0.0
  %1113 = vmatprep.subr.mxu0 0.0
  %1114 = vmatpush1.msra.mxu0 0.0
  %1115 = vmatprep.subr.mxu0 0.0
  %1116 = vmatpush1.msra.mxu0 0.0
  %1117 = vmatprep.subr.mxu0 0.0
  %1118 = vmatpush1.msra.mxu0 0.0
  %1119 = vmatprep.subr.mxu0 0.0
  %1120 = vmatpush1.msra.mxu0 0.0
  %1121 = vmatprep.subr.mxu0 0.0
  %1122 = vmatpush1.msra.mxu0 0.0
  %1123 = vmatprep.subr.mxu0 0.0
  %1124 = vmatpush1.msra.mxu0 0.0
  %1125 = vmatprep.subr.mxu0 0.0
  %1126 = vmatpush1.msra.mxu0 0.0
  %1127 = vmatprep.subr.mxu0 0.0
  %1128 = vmatpush1.msra.mxu0 0.0
  %1129 = vmatprep.subr.mxu0 0.0
  %1130 = vmatpush1.msra.mxu0 0.0
  %1131 = vmatprep.subr.mxu0 0.0
  %1132 = vmatpush1.msra.mxu0 0.0
  %1133 = vmatprep.subr.mxu0 0.0
  %1134 = vmatpush1.msra.mxu0 0.0
  %1135 = vmatprep.subr.mxu0 0.0
  %1136 = vmatpush1.msra.mxu0 0.0
  %1137 = vmatprep.subr.mxu0 0.0
  %1138 = vmatpush1.msra.mxu0 0.0
  %1139 = vmatprep.subr.mxu0 0.0
  %1140 = vmatpush1.msra.mxu0 0.0
  %1141 = vmatprep.subr.mxu0 0.0
  %1142 = vmatpush1.msra.mxu0 0.0
  %1143 = vmatprep.subr.mxu0 0.0
  %1144 = vmatpush1.msra.mxu0 0.0
  %1145 = vmatprep.subr.mxu0 0.0
  %1146 = vmatpush1.msra.mxu0 0.0
  %1147 = vmatprep.mubr.f32.mxu0 0.0
  %1148 = vmatmul.mubr.f32.gmra.mrb[0].mxu0 %v1075
  %v1149 = vpop.f32.mrb[0].mxu0
  %v1150 = vadd.f32 0.0, %v1149
  %v1151 = vpop.f32.mrb[0].mxu0
  %1152 = vmatprep.mubr.f32.mxu0 0.0
  %1153 = vmatmul.mubr.f32.gmra.mrb[0].mxu0 %v1078
  %v1154 = vpop.f32.mrb[0].mxu0
  %v1155 = vadd.f32 0.0, %v1154
  %v1156 = vpop.f32.mrb[0].mxu0
  %1157 = vdwg.mxu0
  %v1158 = vld [vmem:[%s6] sm:$0xff]
  %v1159 = vld [vmem:[%s6 + $0x8] sm:$0xff]
  %1160 = vadd.xlane.f32.xlu0 %v1150
  %v1161 = vpop.xlane.xlu0 %1160
  %1162 = vadd.xlane.f32.xlu0 %v1155
  %v1163 = vpop.xlane.xlu0 %1162
  %v1164 = vmul.f32 %v1150, %v1150
  %v1165 = vmul.f32 %v1155, %v1155
  %1166 = vadd.xlane.f32.xlu0 %v1164
  %v1167 = vpop.xlane.xlu0 %1166
  %1168 = vadd.xlane.f32.xlu0 %v1165
  %v1169 = vpop.xlane.xlu0 %1168
  %v1170 = vmul.f32 %v1161, 0.0078125
  %v1171 = vmul.f32 %v1163, 0.0078125
  %v1172 = vmul.f32 %v1167, 0.0078125
  %v1173 = vmul.f32 %v1169, 0.0078125
  %v1174 = vmul.f32 %v1170, %v1170
  %v1175 = vmul.f32 %v1171, %v1171
  %v1176 = vsub.f32 %v1172, %v1174
  %v1177 = vsub.f32 %v1173, %v1175
  %v1178 = vmax.f32 %v1176, 0.0
  %v1179 = vmax.f32 %v1177, 0.0
  %v1180 = vadd.f32 %v1178, 1e-05
  %v1181 = vadd.f32 %v1179, 1e-05
  %v1182 = vrsqrt.pop %v1180
  %v1183 = vrsqrt.pop %v1181
  %v1184 = vmul.f32 %v1158, %v1182
  %v1185 = vmul.f32 %v1159, %v1183
  %v1186 = vmul.f32 %v1170, %v1184
  %v1187 = vmul.f32 %v1171, %v1185
  %1190 = vrot.lane.b32.xlu0 %v1186, 1
  %v1191 = vpop.permute.xlu0 %1190
  %1192 = vrot.lane.b32.xlu0 %v1187, 1
  %v1193 = vpop.permute.xlu0 %1192
  %v1196 = vsub.f32 %v1158, %v1191
  %v1197 = vsub.f32 %v1159, %v1193
  %1199 = vset.pattern.permute.xlu0 0
  %1200 = vperm.xlu0 %1199, %v1184
  %v1201 = vpop.permute.xlu0 %1200
  %1204 = vset.pattern.permute.xlu0 0
  %1205 = vperm.xlu0 %1204, %v1185
  %v1206 = vpop.permute.xlu0 %1205
  %v1208 = vmul.f32 %v1150, %v1201
  %v1209 = vmul.f32 %v1155, %v1206
  %1211 = vset.pattern.permute.xlu0 1
  %1212 = vperm.xlu0 %1211, %v1196
  %v1213 = vpop.permute.xlu0 %1212
  %1216 = vset.pattern.permute.xlu0 1
  %1217 = vperm.xlu0 %1216, %v1197
  %v1218 = vpop.permute.xlu0 %1217
  %v1220 = vadd.f32 %v1208, %v1213
  %v1221 = vadd.f32 %v1209, %v1218
  %v1222 = vld [vmem:[%s9] sm:$0xff]
  %v1223 = vld [vmem:[%s9 + $0x8] sm:$0xff]
  %v1224 = vadd.f32 %v1220, %v1222
  %v1225 = vadd.f32 %v1221, %v1223
  %v1226 = vmax.f32 %v1224, 0.0
  %v1227 = vmax.f32 %v1225, 0.0
  %1228 = vst [vmem:[%s10] sm:$0xff] %v1226
  %1229 = vst [vmem:[%s10 + $0x8] sm:$0xff] %v1227
  // Predicated region
  $region42: #{bottleneck_forward.1} parent=0 // pred_check
    _
  $region43: #{bottleneck_forward.1} parent=0 // pred_check_branch
    %1231 = sbr.rel (0) target = $region45
  $region44: #{bottleneck_forward.1} parent=0 // pred_region
    _
  $region45: #{bottleneck_forward.1} parent=0 // pred_fallthru
    _
  // Predicated region
  $region46: #{bottleneck_forward.1} parent=0 // pred_check
    _
  $region47: #{bottleneck_forward.1} parent=0 // pred_check_branch
    %1233 = sbr.rel (0) target = $region49
  $region48: #{bottleneck_forward.1} parent=0 // pred_region
    _
  $region49: #{bottleneck_forward.1} parent=0 // pred_fallthru
    _

</llo_original>
